<compile_context>
chip_gen: v7x
topology: tpu7x:2x2x1
jax: 0.10.0
libtpu: 0.0.40
codegen_flags: <defaults>
</compile_context>

<pallas_src>
import jax
import jax.numpy as jnp
from jax.experimental import pallas as pl
from jax.experimental.pallas import tpu as pltpu


# ---------------------------------------------------------------------------
# Fast path: tables resident in VMEM, one-hot MXU gather (no per-row DMAs).
# ---------------------------------------------------------------------------
def _tt_vmem_kernel(uidx_ref, iidx_ref,          # (1, B_pad) int32, VMEM resident
                    user_tbl_ref, item_tbl_ref,  # (Nu, D), (Ni, D), VMEM resident
                    out_ref):                    # (1, 1, TB) f32 output block
    tb = out_ref.shape[-1]
    base = pl.multiple_of(pl.program_id(0) * tb, tb)

    uidx = uidx_ref[:, pl.ds(base, tb)]          # (1, TB) int32
    iidx = iidx_ref[:, pl.ds(base, tb)]          # (1, TB) int32

    u_tbl = user_tbl_ref[...]                    # (Nu, D)
    i_tbl = item_tbl_ref[...]                    # (Ni, D)
    nu, d = u_tbl.shape
    ni = i_tbl.shape[0]

    # One-hot selection matrices laid out (N, TB): lane axis = batch lanes.
    u_oh = (jax.lax.broadcasted_iota(jnp.int32, (nu, tb), 0) == uidx).astype(u_tbl.dtype)
    i_oh = (jax.lax.broadcasted_iota(jnp.int32, (ni, tb), 0) == iidx).astype(i_tbl.dtype)

    # Gather via MXU: contract over the table-row axis (lhs-transposed matmul).
    u_emb = jax.lax.dot_general(u_oh, u_tbl, (((0,), (0,)), ((), ())),
                                preferred_element_type=jnp.float32)   # (TB, D)
    i_emb = jax.lax.dot_general(i_oh, i_tbl, (((0,), (0,)), ((), ())),
                                preferred_element_type=jnp.float32)   # (TB, D)

    prod = u_emb * i_emb                          # (TB, D) f32, VPU

    # Row-sum via ones-vector MXU contraction -> lane-dense (1, TB) store.
    ones_row = jnp.ones((1, d), jnp.float32)
    out_ref[...] = jax.lax.dot_general(
        ones_row, prod, (((1,), (1,)), ((), ())),
        preferred_element_type=jnp.float32).reshape(1, 1, tb)


def _forward_vmem_onehot(uidx, iidx, user_table, item_table, num_blocks, block_b):
    num_users, d = user_table.shape
    num_items = item_table.shape[0]
    b_pad = num_blocks * block_b
    uidx2 = uidx.reshape(1, b_pad)
    iidx2 = iidx.reshape(1, b_pad)

    elt = user_table.dtype.itemsize
    cost = pl.CostEstimate(
        flops=2 * b_pad * d * (num_users + num_items + 1),
        transcendentals=0,
        bytes_accessed=(num_users + num_items) * d * elt + 2 * b_pad * 4 + b_pad * 4,
    )

    return pl.pallas_call(
        _tt_vmem_kernel,
        out_shape=jax.ShapeDtypeStruct((num_blocks, 1, block_b), jnp.float32),
        grid=(num_blocks,),
        in_specs=[
            pl.BlockSpec((1, b_pad), lambda i: (0, 0)),          # user indices (resident)
            pl.BlockSpec((1, b_pad), lambda i: (0, 0)),          # item indices (resident)
            pl.BlockSpec((num_users, d), lambda i: (0, 0)),      # full user table (resident)
            pl.BlockSpec((num_items, d), lambda i: (0, 0)),      # full item table (resident)
        ],
        out_specs=pl.BlockSpec((1, 1, block_b), lambda i: (i, 0, 0)),
        compiler_params=pltpu.CompilerParams(dimension_semantics=("parallel",)),
        cost_estimate=cost,
    )(uidx2, iidx2, user_table, item_table)


# ---------------------------------------------------------------------------
# Large-table path: tables in HBM, per-row async-copy gather into VMEM.
# ---------------------------------------------------------------------------
def _tt_hbm_kernel(user_idx_ref, item_idx_ref,   # SMEM (B_pad,) int32 (scalar prefetch)
                   user_tbl_ref, item_tbl_ref,   # HBM refs (Nu, D), (Ni, D)
                   out_ref,                      # VMEM (1, 1, TB) f32 output block
                   ubuf, ibuf,                   # VMEM (TB, D) gather scratch
                   sem):                         # DMA semaphores, shape (2,)
    tb = ubuf.shape[0]
    base = pl.program_id(0) * tb

    # Issue all 2*TB row-gather DMAs for this block; they overlap in flight.
    @pl.loop(0, tb)
    def _issue(t):
        u = user_idx_ref[base + t]
        it = item_idx_ref[base + t]
        pltpu.make_async_copy(user_tbl_ref.at[pl.ds(u, 1)],
                              ubuf.at[pl.ds(t, 1)], sem.at[0]).start()
        pltpu.make_async_copy(item_tbl_ref.at[pl.ds(it, 1)],
                              ibuf.at[pl.ds(t, 1)], sem.at[1]).start()

    # Wait for all of them (each wait accounts for one row-sized transfer).
    @pl.loop(0, tb)
    def _wait(t):
        del t
        pltpu.make_async_copy(user_tbl_ref.at[pl.ds(0, 1)],
                              ubuf.at[pl.ds(0, 1)], sem.at[0]).wait()
        pltpu.make_async_copy(item_tbl_ref.at[pl.ds(0, 1)],
                              ibuf.at[pl.ds(0, 1)], sem.at[1]).wait()

    u = ubuf[...].astype(jnp.float32)            # keep f32 math (v5e has no bf16 VPU)
    v = ibuf[...].astype(jnp.float32)
    prod = u * v                                 # (TB, D) VPU multiply

    # Row-sum via ones-vector MXU contraction -> lane-dense (1, TB) store.
    ones_row = jnp.ones((1, prod.shape[1]), jnp.float32)
    out_ref[...] = jax.lax.dot_general(
        ones_row, prod, (((1,), (1,)), ((), ())),
        preferred_element_type=jnp.float32).reshape(1, 1, tb)


def _forward_hbm_gather(uidx, iidx, user_table, item_table, num_blocks, block_b):
    num_users, d = user_table.shape
    num_items = item_table.shape[0]
    b_pad = num_blocks * block_b

    elt = user_table.dtype.itemsize
    cost = pl.CostEstimate(
        flops=2 * b_pad * d,
        transcendentals=0,
        bytes_accessed=2 * b_pad * d * elt + 2 * b_pad * 4 + b_pad * 4,
    )

    return pl.pallas_call(
        _tt_hbm_kernel,
        out_shape=jax.ShapeDtypeStruct((num_blocks, 1, block_b), jnp.float32),
        grid_spec=pltpu.PrefetchScalarGridSpec(
            num_scalar_prefetch=2,                     # user_idx, item_idx -> SMEM
            grid=(num_blocks,),
            in_specs=[
                pl.BlockSpec(memory_space=pl.ANY),     # user table stays in HBM
                pl.BlockSpec(memory_space=pl.ANY),     # item table stays in HBM
            ],
            out_specs=pl.BlockSpec((1, 1, block_b),
                                   lambda i, u_ref, it_ref: (i, 0, 0)),
            scratch_shapes=[
                pltpu.VMEM((block_b, d), user_table.dtype),
                pltpu.VMEM((block_b, d), item_table.dtype),
                pltpu.SemaphoreType.DMA((2,)),
            ],
        ),
        compiler_params=pltpu.CompilerParams(dimension_semantics=("parallel",)),
        cost_estimate=cost,
    )(uidx, iidx, user_table, item_table)


# ---------------------------------------------------------------------------
# Wrapper
# ---------------------------------------------------------------------------
def tt_recommender_forward(user_idx, item_idx, user_table, item_table, *,
                           block_b=128,
                           vmem_table_budget_bytes=4 * 1024 * 1024,
                           max_onehot_rows=4096,
                           force_hbm_gather=False):
    """user_idx, item_idx: int (B,); tables: (N, D) float. Returns (B,) f32."""
    B = int(user_idx.shape[0])
    num_users, d = user_table.shape
    num_items, d2 = item_table.shape
    assert d == d2, "embedding dims must match"

    num_blocks = pl.cdiv(B, block_b)
    b_pad = num_blocks * block_b

    # nn.Embedding errors on out-of-range indices; here we clamp so gathers
    # always stay in bounds, and pad the tail block with row 0 (padded lanes
    # are discarded below).
    uidx = jnp.clip(user_idx.astype(jnp.int32), 0, num_users - 1)
    iidx = jnp.clip(item_idx.astype(jnp.int32), 0, num_items - 1)
    uidx = jnp.pad(uidx, (0, b_pad - B))
    iidx = jnp.pad(iidx, (0, b_pad - B))

    table_bytes = (num_users + num_items) * d * user_table.dtype.itemsize
    use_vmem_path = (not force_hbm_gather
                     and table_bytes <= vmem_table_budget_bytes
                     and max(num_users, num_items) <= max_onehot_rows)

    if use_vmem_path:
        out = _forward_vmem_onehot(uidx, iidx, user_table, item_table,
                                   num_blocks, block_b)
    else:
        out = _forward_hbm_gather(uidx, iidx, user_table, item_table,
                                  num_blocks, block_b)
    return out.reshape(-1)[:B]


def init_params(key, num_users, num_items, embedding_dim):
    """Deterministic init matching nn.Embedding's default N(0, 1)."""
    k_user, k_item = jax.random.split(key)
    user_table = jax.random.normal(k_user, (num_users, embedding_dim), jnp.float32)
    item_table = jax.random.normal(k_item, (num_items, embedding_dim), jnp.float32)
    return user_table, item_table


if __name__ == "__main__":
    num_users = 16
    num_items = 32
    embedding_dim = 32
    batch = 8

    key = jax.random.PRNGKey(0)
    k_params, k_uidx, k_iidx = jax.random.split(key, 3)

    user_table, item_table = init_params(k_params, num_users, num_items, embedding_dim)
    user_idx = jax.random.randint(k_uidx, (batch,), 0, num_users, dtype=jnp.int32)
    item_idx = jax.random.randint(k_iidx, (batch,), 0, num_items, dtype=jnp.int32)

    # Pure-JAX reference for correctness check.
    ref = jnp.sum(user_table[user_idx] * item_table[item_idx], axis=-1)

    # Fast path (tables fit in VMEM -> one-hot MXU gather).
    out_fast = jax.block_until_ready(
        tt_recommender_forward(user_idx, item_idx, user_table, item_table))
    assert out_fast.shape == (batch,)
    assert jnp.allclose(out_fast, ref, atol=1e-5, rtol=1e-5), (out_fast, ref)

    # Large-table path (HBM row-gather DMAs), forced for coverage.
    out_hbm = jax.block_until_ready(
        tt_recommender_forward(user_idx, item_idx, user_table, item_table,
                               force_hbm_gather=True))
    assert out_hbm.shape == (batch,)
    assert jnp.allclose(out_hbm, ref, atol=1e-5, rtol=1e-5), (out_hbm, ref)

    print("KERNEL_OK")
</pallas_src>

<mosaic_0001>
module attributes {stable_mosaic.version = 11 : i64} {
  func.func @_tt_vmem_kernel(%arg0: i32, %arg1: memref<1x128xi32, #tpu.memory_space<vmem>>, %arg2: memref<1x128xi32, #tpu.memory_space<vmem>>, %arg3: memref<16x32xf32, #tpu.memory_space<vmem>>, %arg4: memref<32x32xf32, #tpu.memory_space<vmem>>, %arg5: memref<1x1x128xf32, #tpu.memory_space<vmem>>) attributes {dimension_semantics = [#tpu.dimension_semantics<parallel>], iteration_bounds = array<i64: 1>, scalar_prefetch = 0 : i64, scratch_operands = 0 : i64, tpu.core_type = #tpu.core_type<tc>, window_params = [{pipeline_mode = #tpu.pipeline_mode<synchronous>, transform_indices = @transform_0, window_bounds = array<i64: 1, 128>}, {pipeline_mode = #tpu.pipeline_mode<synchronous>, transform_indices = @transform_1, window_bounds = array<i64: 1, 128>}, {pipeline_mode = #tpu.pipeline_mode<synchronous>, transform_indices = @transform_2, window_bounds = array<i64: 16, 32>}, {pipeline_mode = #tpu.pipeline_mode<synchronous>, transform_indices = @transform_3, window_bounds = array<i64: 32, 32>}, {transform_indices = @transform_4, window_bounds = array<i64: 1, 1, 128>}]} {
    %c128_i32 = arith.constant 128 : i32
    %0 = arith.muli %arg0, %c128_i32 : i32
    %1 = tpu.assume_multiple %0, 128 : i32
    %c0 = arith.constant 0 : index
    %2 = arith.index_cast %1 : i32 to index
    %3 = vector.load %arg1[%c0, %2] : memref<1x128xi32, #tpu.memory_space<vmem>>, vector<1x128xi32>
    %c0_0 = arith.constant 0 : index
    %4 = arith.index_cast %1 : i32 to index
    %5 = vector.load %arg2[%c0_0, %4] : memref<1x128xi32, #tpu.memory_space<vmem>>, vector<1x128xi32>
    %c0_1 = arith.constant 0 : index
    %c0_2 = arith.constant 0 : index
    %6 = vector.load %arg3[%c0_1, %c0_2] : memref<16x32xf32, #tpu.memory_space<vmem>>, vector<16x32xf32>
    %c0_3 = arith.constant 0 : index
    %c0_4 = arith.constant 0 : index
    %7 = vector.load %arg4[%c0_3, %c0_4] : memref<32x32xf32, #tpu.memory_space<vmem>>, vector<32x32xf32>
    %8 = tpu.iota {dimensions = array<i32: 0>} : vector<16x128xi32>
    %9 = vector.broadcast %3 : vector<1x128xi32> to vector<16x128xi32>
    %10 = arith.cmpi eq, %8, %9 : vector<16x128xi32>
    %11 = arith.extui %10 : vector<16x128xi1> to vector<16x128xi32>
    %12 = arith.sitofp %11 : vector<16x128xi32> to vector<16x128xf32>
    %13 = tpu.iota {dimensions = array<i32: 0>} : vector<32x128xi32>
    %14 = vector.broadcast %5 : vector<1x128xi32> to vector<32x128xi32>
    %15 = arith.cmpi eq, %13, %14 : vector<32x128xi32>
    %16 = arith.extui %15 : vector<32x128xi1> to vector<32x128xi32>
    %17 = arith.sitofp %16 : vector<32x128xi32> to vector<32x128xf32>
    %cst = arith.constant dense<0.000000e+00> : vector<128x32xf32>
    %18 = tpu.matmul %12, %6, %cst {dimension_numbers = #tpu.dot_dimension_numbers<[0], [0], [1], [1], [0, 1, 1, 1], [], []>} : vector<16x128xf32>, vector<16x32xf32>, vector<128x32xf32> -> vector<128x32xf32>
    %cst_5 = arith.constant dense<0.000000e+00> : vector<128x32xf32>
    %19 = tpu.matmul %17, %7, %cst_5 {dimension_numbers = #tpu.dot_dimension_numbers<[0], [0], [1], [1], [0, 1, 1, 1], [], []>} : vector<32x128xf32>, vector<32x32xf32>, vector<128x32xf32> -> vector<128x32xf32>
    %20 = arith.mulf %18, %19 : vector<128x32xf32>
    %cst_6 = arith.constant 1.000000e+00 : f32
    %21 = vector.broadcast %cst_6 : f32 to vector<1x32xf32>
    %cst_7 = arith.constant dense<0.000000e+00> : vector<1x128xf32>
    %22 = tpu.matmul %21, %20, %cst_7 {dimension_numbers = #tpu.dot_dimension_numbers<[1], [1], [0], [0], [0, 0, 1, 0], [], []>} : vector<1x32xf32>, vector<128x32xf32>, vector<1x128xf32> -> vector<1x128xf32>
    %23 = vector.shape_cast %22 : vector<1x128xf32> to vector<1x1x128xf32>
    %c0_8 = arith.constant 0 : index
    %c0_9 = arith.constant 0 : index
    %c0_10 = arith.constant 0 : index
    %24 = vector.load %arg5[%c0_8, %c0_9, %c0_10] : memref<1x1x128xf32, #tpu.memory_space<vmem>>, vector<1x1x128xf32>
    tpu.vector_store %arg5[%c0_8, %c0_9, %c0_10], %23 {strides = array<i32>} : memref<1x1x128xf32, #tpu.memory_space<vmem>>, vector<1x1x128xf32>,
    return
  }
  func.func @transform_0(%arg0: i32) -> (i32, i32) {
    %c0_i32 = arith.constant 0 : i32
    %c0_i32_0 = arith.constant 0 : i32
    %c0_i32_1 = arith.constant 0 : i32
    return %c0_i32, %c0_i32_0 : i32, i32
  }
  func.func @transform_1(%arg0: i32) -> (i32, i32) {
    %c0_i32 = arith.constant 0 : i32
    %c0_i32_0 = arith.constant 0 : i32
    %c0_i32_1 = arith.constant 0 : i32
    return %c0_i32, %c0_i32_0 : i32, i32
  }
  func.func @transform_2(%arg0: i32) -> (i32, i32) {
    %c0_i32 = arith.constant 0 : i32
    %c0_i32_0 = arith.constant 0 : i32
    %c0_i32_1 = arith.constant 0 : i32
    return %c0_i32, %c0_i32_0 : i32, i32
  }
  func.func @transform_3(%arg0: i32) -> (i32, i32) {
    %c0_i32 = arith.constant 0 : i32
    %c0_i32_0 = arith.constant 0 : i32
    %c0_i32_1 = arith.constant 0 : i32
    return %c0_i32, %c0_i32_0 : i32, i32
  }
  func.func @transform_4(%arg0: i32) -> (i32, i32, i32) {
    %c0_i32 = arith.constant 0 : i32
    %c0_i32_0 = arith.constant 0 : i32
    %c0_i32_1 = arith.constant 0 : i32
    return %arg0, %c0_i32, %c0_i32_0 : i32, i32, i32
  }
}

</mosaic_0001>

<llo_original>
// kernel: tpu_custom_call.1
$region0: #{tpu_custom_call.1}
  #allocation0 [shape = 'u32[]', space=smem, size = 0x4, offset = 0x4, fixed_abs, tag = 'smem constant byte address 0x4 - core index']
  #allocation1 [shape = 'u32[144,128]{1,0:T(1,128)}', space=vmem, size = 0x12000, scoped, tag = 'internal scratch']
  %s0 = inlined_call_operand.hbm [shape: s32[1,128], index: 0, kind: input, shape index: {}]
  %s1 = inlined_call_operand.vmem [shape: s32[1,128], index: 1, kind: input, shape index: {}]
  %s2 = inlined_call_operand.hbm [shape: f32[16,32], index: 2, kind: input, shape index: {}]
  %s3 = inlined_call_operand.hbm [shape: f32[32,32], index: 3, kind: input, shape index: {}]
  %s4 = inlined_call_operand.hbm [shape: f32[1,1,128], index: 4, kind: output, shape index: {}]
  %s5 = sld [smem:[#allocation0]]
  $region38: #{tpu_custom_call.1} parent=0
    _
  %s7 = ssub.s32 1, %s5
  %s8 = scalar_select 0, %s7, %s5
  $region1: #{tpu_custom_call.1} parent=0
    #allocation2 [shape = 'u8[512]{0}', space=vmem, size = 0x400, scoped, tag = 'input window, operand 0, single buffered']
    #allocation3 [shape = 's32[1]{0}', space=sflag, size = 0x4, scoped, tag = 'scoped memory for tpu_custom_call.1']
    #allocation4 [shape = 's32[1]{0}', space=sflag, size = 0x4, scoped, tag = 'scoped memory for tpu_custom_call.1']
    #allocation5 [shape = 'u8[8192]{0}', space=vmem, size = 0x2000, scoped, tag = 'input window, operand 2, single buffered']
    #allocation6 [shape = 's32[1]{0}', space=sflag, size = 0x4, scoped, tag = 'scoped memory for tpu_custom_call.1']
    #allocation7 [shape = 'u8[16384]{0}', space=vmem, size = 0x4000, scoped, tag = 'input window, operand 3, single buffered']
    #allocation8 [shape = 'u8[512]{0}', space=vmem, size = 0x400, scoped, tag = 'output window, operand 0, single buffered']
    %9 = vsyncpa [#allocation3], 0
    %10 = vsyncpa [#allocation6], 0
    %11 = vsyncpa [#allocation4], 0
    // Predicated region
    $region2: #{tpu_custom_call.1} parent=1 // pred_check
      _
    $region3: #{tpu_custom_call.1} parent=1 // pred_check_branch
      %13 = sbr.rel (0) target = $region5
    $region4: #{tpu_custom_call.1} parent=1 // pred_region
      %s15 = ssub.s32 16, 16
      %16 = vsyncadd [#allocation3], %s15
      %s18 = sshll.u32 [#allocation2], 4
      %s19 = int_to_ptr.vmem [resolvable:$true] %s18
      %21 = dma.hbm_to_vmem [thread:$0]  %s0, 16, %s19, [#allocation3]
    $region5: #{tpu_custom_call.1} parent=1 // pred_fallthru
      _
    // Predicated region
    $region6: #{tpu_custom_call.1} parent=1 // pred_check
      _
    $region7: #{tpu_custom_call.1} parent=1 // pred_check_branch
      %23 = sbr.rel (0) target = $region9
    $region8: #{tpu_custom_call.1} parent=1 // pred_region
      _
    $region9: #{tpu_custom_call.1} parent=1 // pred_fallthru
      _
    // Predicated region
    $region10: #{tpu_custom_call.1} parent=1 // pred_check
      _
    $region11: #{tpu_custom_call.1} parent=1 // pred_check_branch
      %25 = sbr.rel (0) target = $region13
    $region12: #{tpu_custom_call.1} parent=1 // pred_region
      %s27 = ssub.s32 256, 256
      %28 = vsyncadd [#allocation6], %s27
      %s29 = sshll.u32 [#allocation5], 4
      %s30 = int_to_ptr.vmem [resolvable:$true] %s29
      %35 = dma.hbm_to_vmem [thread:$0]  %s2, 256, %s30, [#allocation6], 128, 128, 8
    $region13: #{tpu_custom_call.1} parent=1 // pred_fallthru
      _
    // Predicated region
    $region14: #{tpu_custom_call.1} parent=1 // pred_check
      _
    $region15: #{tpu_custom_call.1} parent=1 // pred_check_branch
      %37 = sbr.rel (0) target = $region17
    $region16: #{tpu_custom_call.1} parent=1 // pred_region
      %s39 = ssub.s32 512, 512
      %40 = vsyncadd [#allocation6], %s39
      %s41 = sshll.u32 [#allocation7], 4
      %s42 = int_to_ptr.vmem [resolvable:$true] %s41
      %47 = dma.hbm_to_vmem [thread:$0]  %s3, 512, %s42, [#allocation6], 128, 128, 8
    $region17: #{tpu_custom_call.1} parent=1 // pred_fallthru
      _
    // Predicated region
    $region18: #{tpu_custom_call.1} parent=1 // pred_check
      _
    $region19: #{tpu_custom_call.1} parent=1 // pred_check_branch
      %49 = sbr.rel (0) target = $region21
    $region20: #{tpu_custom_call.1} parent=1 // pred_region
      %50 = dma.done [#allocation3], 16
    $region21: #{tpu_custom_call.1} parent=1 // pred_fallthru
      _
    // Predicated region
    $region22: #{tpu_custom_call.1} parent=1 // pred_check
      _
    $region23: #{tpu_custom_call.1} parent=1 // pred_check_branch
      %52 = sbr.rel (0) target = $region25
    $region24: #{tpu_custom_call.1} parent=1 // pred_region
      %53 = dma.done [#allocation6], 256
    $region25: #{tpu_custom_call.1} parent=1 // pred_fallthru
      _
    // Predicated region
    $region26: #{tpu_custom_call.1} parent=1 // pred_check
      _
    $region27: #{tpu_custom_call.1} parent=1 // pred_check_branch
      %55 = sbr.rel (0) target = $region29
    $region28: #{tpu_custom_call.1} parent=1 // pred_region
      %56 = dma.done [#allocation6], 512
    $region29: #{tpu_custom_call.1} parent=1 // pred_fallthru
      _
    %s57 = smul.u32 0, 128
    %s58 = sshra.s32 %s57, 7
    %s59 = sand.u32 %s57, 127
    %s60 = scalar_lea.vmem [#allocation2], %s58
    %v61 = vld [vmem:[%s60] sm:$0x1]
    %s62 = scalar_lea.vmem %s1, %s58
    %v63 = vld [vmem:[%s62] sm:$0x1]
    %v64 = vld [vmem:[#allocation5] sm:$0xff]
    %v65 = vld [vmem:[#allocation5 + $0x8] sm:$0xff]
    %v66 = vld [vmem:[#allocation7] sm:$0xff]
    %v67 = vld [vmem:[#allocation7 + $0x8] sm:$0xff]
    %v68 = vld [vmem:[#allocation7 + $0x10] sm:$0xff]
    %v69 = vld [vmem:[#allocation7 + $0x18] sm:$0xff]
    %v70 = vlaneseq
    %v71 = vshrl.u32 %v70, 7
    %v72 = vadd.s32 %v71, 8
    %v73 = vlaneseq
    %v74 = vshrl.u32 %v73, 7
    %v75 = vsub.s32 0, %v74
    %v76 = vrot.slane %v61, %v75
    %vm77 = vcmp.eq.s32.totalorder %v71, %v76
    %vm78 = vcmp.eq.s32.totalorder %v72, %v76
    %v79 = vsel %vm77, 1, 0
    %v80 = vsel %vm78, 1, 0
    %v81 = vcvt.s32.f32 %v79
    %v82 = vcvt.s32.f32 %v80
    %v83 = vadd.s32 %v71, 16
    %v84 = vadd.s32 %v71, 24
    %v85 = vlaneseq
    %v86 = vshrl.u32 %v85, 7
    %v87 = vsub.s32 0, %v86
    %v88 = vrot.slane %v63, %v87
    %vm89 = vcmp.eq.s32.totalorder %v71, %v88
    %vm90 = vcmp.eq.s32.totalorder %v72, %v88
    %vm91 = vcmp.eq.s32.totalorder %v83, %v88
    %vm92 = vcmp.eq.s32.totalorder %v84, %v88
    %v93 = vsel %vm89, 1, 0
    %v94 = vsel %vm90, 1, 0
    %v95 = vsel %vm91, 1, 0
    %v96 = vsel %vm92, 1, 0
    %v97 = vcvt.s32.f32 %v93
    %v98 = vcvt.s32.f32 %v94
    %v99 = vcvt.s32.f32 %v95
    %v100 = vcvt.s32.f32 %v96
    %101 = vxpose.xlu0.b32.start [1/16] %v81, 128
    %102 = vxpose.xlu0.b32.cont [2/16] %v82, 128
    %103 = vxpose.xlu0.b32.cont [3/16] 0.0, 128
    %104 = vxpose.xlu0.b32.cont [4/16] 0.0, 128
    %105 = vxpose.xlu0.b32.cont [5/16] 0.0, 128
    %106 = vxpose.xlu0.b32.cont [6/16] 0.0, 128
    %107 = vxpose.xlu0.b32.cont [7/16] 0.0, 128
    %108 = vxpose.xlu0.b32.cont [8/16] 0.0, 128
    %109 = vxpose.xlu0.b32.cont [9/16] 0.0, 128
    %110 = vxpose.xlu0.b32.cont [10/16] 0.0, 128
    %111 = vxpose.xlu0.b32.cont [11/16] 0.0, 128
    %112 = vxpose.xlu0.b32.cont [12/16] 0.0, 128
    %113 = vxpose.xlu0.b32.cont [13/16] 0.0, 128
    %114 = vxpose.xlu0.b32.cont [14/16] 0.0, 128
    %115 = vxpose.xlu0.b32.cont [15/16] 0.0, 128
    %116 = vxpose.xlu0.b32.end [16/16] 0.0, 128
    %v117 = vpop.trf.xlu0
    %v118 = vpop.trf.xlu0
    %v119 = vpop.trf.xlu0
    %v120 = vpop.trf.xlu0
    %v121 = vpop.trf.xlu0
    %v122 = vpop.trf.xlu0
    %v123 = vpop.trf.xlu0
    %v124 = vpop.trf.xlu0
    %v125 = vpop.trf.xlu0
    %v126 = vpop.trf.xlu0
    %v127 = vpop.trf.xlu0
    %v128 = vpop.trf.xlu0
    %v129 = vpop.trf.xlu0
    %v130 = vpop.trf.xlu0
    %v131 = vpop.trf.xlu0
    %v132 = vpop.trf.xlu0
    %vm133 = vcmask 130048
    %v135 = vsel %vm133, %v117, 0
    %v138 = vsel %vm133, %v118, 0
    %v141 = vsel %vm133, %v119, 0
    %v144 = vsel %vm133, %v120, 0
    %v147 = vsel %vm133, %v121, 0
    %v150 = vsel %vm133, %v122, 0
    %v153 = vsel %vm133, %v123, 0
    %v156 = vsel %vm133, %v124, 0
    %v159 = vsel %vm133, %v125, 0
    %v162 = vsel %vm133, %v126, 0
    %v165 = vsel %vm133, %v127, 0
    %v168 = vsel %vm133, %v128, 0
    %v171 = vsel %vm133, %v129, 0
    %v174 = vsel %vm133, %v130, 0
    %v177 = vsel %vm133, %v131, 0
    %v180 = vsel %vm133, %v132, 0
    %182 = vmatprep.subr.mxu0 0.0
    %183 = vmatpush1.msra.mxu0 %v64
    %184 = vmatprep.subr.mxu0 0.0
    %185 = vmatpush1.msra.mxu0 %v65
    %186 = vmatprep.subr.mxu0 0.0
    %187 = vmatpush1.msra.mxu0 0.0
    %188 = vmatprep.subr.mxu0 0.0
    %189 = vmatpush1.msra.mxu0 0.0
    %190 = vmatprep.subr.mxu0 0.0
    %191 = vmatpush1.msra.mxu0 0.0
    %192 = vmatprep.subr.mxu0 0.0
    %193 = vmatpush1.msra.mxu0 0.0
    %194 = vmatprep.subr.mxu0 0.0
    %195 = vmatpush1.msra.mxu0 0.0
    %196 = vmatprep.subr.mxu0 0.0
    %197 = vmatpush1.msra.mxu0 0.0
    %198 = vmatprep.subr.mxu0 0.0
    %199 = vmatpush1.msra.mxu0 0.0
    %200 = vmatprep.subr.mxu0 0.0
    %201 = vmatpush1.msra.mxu0 0.0
    %202 = vmatprep.subr.mxu0 0.0
    %203 = vmatpush1.msra.mxu0 0.0
    %204 = vmatprep.subr.mxu0 0.0
    %205 = vmatpush1.msra.mxu0 0.0
    %206 = vmatprep.subr.mxu0 0.0
    %207 = vmatpush1.msra.mxu0 0.0
    %208 = vmatprep.subr.mxu0 0.0
    %209 = vmatpush1.msra.mxu0 0.0
    %210 = vmatprep.subr.mxu0 0.0
    %211 = vmatpush1.msra.mxu0 0.0
    %212 = vmatprep.subr.mxu0 0.0
    %213 = vmatpush1.msra.mxu0 0.0
    %214 = vmatprep.subr.mxu0 0.0
    %215 = vmatpush1.msra.mxu0 0.0
    %216 = vmatprep.subr.mxu0 0.0
    %217 = vmatpush1.msra.mxu0 0.0
    %218 = vmatprep.subr.mxu0 0.0
    %219 = vmatpush1.msra.mxu0 0.0
    %220 = vmatprep.subr.mxu0 0.0
    %221 = vmatpush1.msra.mxu0 0.0
    %222 = vmatprep.subr.mxu0 0.0
    %223 = vmatpush1.msra.mxu0 0.0
    %224 = vmatprep.subr.mxu0 0.0
    %225 = vmatpush1.msra.mxu0 0.0
    %226 = vmatprep.subr.mxu0 0.0
    %227 = vmatpush1.msra.mxu0 0.0
    %228 = vmatprep.subr.mxu0 0.0
    %229 = vmatpush1.msra.mxu0 0.0
    %230 = vmatprep.subr.mxu0 0.0
    %231 = vmatpush1.msra.mxu0 0.0
    %232 = vmatprep.subr.mxu0 0.0
    %233 = vmatpush1.msra.mxu0 0.0
    %234 = vmatprep.subr.mxu0 0.0
    %235 = vmatpush1.msra.mxu0 0.0
    %236 = vmatprep.subr.mxu0 0.0
    %237 = vmatpush1.msra.mxu0 0.0
    %238 = vmatprep.subr.mxu0 0.0
    %239 = vmatpush1.msra.mxu0 0.0
    %240 = vmatprep.subr.mxu0 0.0
    %241 = vmatpush1.msra.mxu0 0.0
    %242 = vmatprep.subr.mxu0 0.0
    %243 = vmatpush1.msra.mxu0 0.0
    %244 = vmatprep.subr.mxu0 0.0
    %245 = vmatpush1.msra.mxu0 0.0
    %246 = vmatprep.mubr.f32.mxu0 0.0
    %247 = vmatmul.mubr.f32.gmra.mrb[0].mxu0 %v135
    %v248 = vpop.f32.mrb[0].mxu0
    %v249 = vadd.f32 0.0, %v248
    %v250 = vpop.f32.mrb[0].mxu0
    %251 = vmatprep.mubr.f32.mxu0 0.0
    %252 = vmatmul.mubr.f32.gmra.mrb[0].mxu0 %v138
    %v253 = vpop.f32.mrb[0].mxu0
    %v254 = vadd.f32 0.0, %v253
    %v255 = vpop.f32.mrb[0].mxu0
    %256 = vmatprep.mubr.f32.mxu0 0.0
    %257 = vmatmul.mubr.f32.gmra.mrb[0].mxu0 %v141
    %v258 = vpop.f32.mrb[0].mxu0
    %v259 = vadd.f32 0.0, %v258
    %v260 = vpop.f32.mrb[0].mxu0
    %261 = vmatprep.mubr.f32.mxu0 0.0
    %262 = vmatmul.mubr.f32.gmra.mrb[0].mxu0 %v144
    %v263 = vpop.f32.mrb[0].mxu0
    %v264 = vadd.f32 0.0, %v263
    %v265 = vpop.f32.mrb[0].mxu0
    %266 = vmatprep.mubr.f32.mxu0 0.0
    %267 = vmatmul.mubr.f32.gmra.mrb[0].mxu0 %v147
    %v268 = vpop.f32.mrb[0].mxu0
    %v269 = vadd.f32 0.0, %v268
    %v270 = vpop.f32.mrb[0].mxu0
    %271 = vmatprep.mubr.f32.mxu0 0.0
    %272 = vmatmul.mubr.f32.gmra.mrb[0].mxu0 %v150
    %v273 = vpop.f32.mrb[0].mxu0
    %v274 = vadd.f32 0.0, %v273
    %v275 = vpop.f32.mrb[0].mxu0
    %276 = vmatprep.mubr.f32.mxu0 0.0
    %277 = vmatmul.mubr.f32.gmra.mrb[0].mxu0 %v153
    %v278 = vpop.f32.mrb[0].mxu0
    %v279 = vadd.f32 0.0, %v278
    %v280 = vpop.f32.mrb[0].mxu0
    %281 = vmatprep.mubr.f32.mxu0 0.0
    %282 = vmatmul.mubr.f32.gmra.mrb[0].mxu0 %v156
    %v283 = vpop.f32.mrb[0].mxu0
    %v284 = vadd.f32 0.0, %v283
    %v285 = vpop.f32.mrb[0].mxu0
    %286 = vmatprep.mubr.f32.mxu0 0.0
    %287 = vmatmul.mubr.f32.gmra.mrb[0].mxu0 %v159
    %v288 = vpop.f32.mrb[0].mxu0
    %v289 = vadd.f32 0.0, %v288
    %v290 = vpop.f32.mrb[0].mxu0
    %291 = vmatprep.mubr.f32.mxu0 0.0
    %292 = vmatmul.mubr.f32.gmra.mrb[0].mxu0 %v162
    %v293 = vpop.f32.mrb[0].mxu0
    %v294 = vadd.f32 0.0, %v293
    %v295 = vpop.f32.mrb[0].mxu0
    %296 = vmatprep.mubr.f32.mxu0 0.0
    %297 = vmatmul.mubr.f32.gmra.mrb[0].mxu0 %v165
    %v298 = vpop.f32.mrb[0].mxu0
    %v299 = vadd.f32 0.0, %v298
    %v300 = vpop.f32.mrb[0].mxu0
    %301 = vmatprep.mubr.f32.mxu0 0.0
    %302 = vmatmul.mubr.f32.gmra.mrb[0].mxu0 %v168
    %v303 = vpop.f32.mrb[0].mxu0
    %v304 = vadd.f32 0.0, %v303
    %v305 = vpop.f32.mrb[0].mxu0
    %306 = vmatprep.mubr.f32.mxu0 0.0
    %307 = vmatmul.mubr.f32.gmra.mrb[0].mxu0 %v171
    %v308 = vpop.f32.mrb[0].mxu0
    %v309 = vadd.f32 0.0, %v308
    %v310 = vpop.f32.mrb[0].mxu0
    %311 = vmatprep.mubr.f32.mxu0 0.0
    %312 = vmatmul.mubr.f32.gmra.mrb[0].mxu0 %v174
    %v313 = vpop.f32.mrb[0].mxu0
    %v314 = vadd.f32 0.0, %v313
    %v315 = vpop.f32.mrb[0].mxu0
    %316 = vmatprep.mubr.f32.mxu0 0.0
    %317 = vmatmul.mubr.f32.gmra.mrb[0].mxu0 %v177
    %v318 = vpop.f32.mrb[0].mxu0
    %v319 = vadd.f32 0.0, %v318
    %v320 = vpop.f32.mrb[0].mxu0
    %321 = vmatprep.mubr.f32.mxu0 0.0
    %322 = vmatmul.mubr.f32.gmra.mrb[0].mxu0 %v180
    %v323 = vpop.f32.mrb[0].mxu0
    %v324 = vadd.f32 0.0, %v323
    %v325 = vpop.f32.mrb[0].mxu0
    %326 = vdwg.mxu0
    %327 = vxpose.xlu0.b32.start [1/16] %v97, 128
    %328 = vxpose.xlu0.b32.cont [2/16] %v98, 128
    %329 = vxpose.xlu0.b32.cont [3/16] %v99, 128
    %330 = vxpose.xlu0.b32.cont [4/16] %v100, 128
    %331 = vxpose.xlu0.b32.cont [5/16] 0.0, 128
    %332 = vxpose.xlu0.b32.cont [6/16] 0.0, 128
    %333 = vxpose.xlu0.b32.cont [7/16] 0.0, 128
    %334 = vxpose.xlu0.b32.cont [8/16] 0.0, 128
    %335 = vxpose.xlu0.b32.cont [9/16] 0.0, 128
    %336 = vxpose.xlu0.b32.cont [10/16] 0.0, 128
    %337 = vxpose.xlu0.b32.cont [11/16] 0.0, 128
    %338 = vxpose.xlu0.b32.cont [12/16] 0.0, 128
    %339 = vxpose.xlu0.b32.cont [13/16] 0.0, 128
    %340 = vxpose.xlu0.b32.cont [14/16] 0.0, 128
    %341 = vxpose.xlu0.b32.cont [15/16] 0.0, 128
    %342 = vxpose.xlu0.b32.end [16/16] 0.0, 128
    %v343 = vpop.trf.xlu0
    %v344 = vpop.trf.xlu0
    %v345 = vpop.trf.xlu0
    %v346 = vpop.trf.xlu0
    %v347 = vpop.trf.xlu0
    %v348 = vpop.trf.xlu0
    %v349 = vpop.trf.xlu0
    %v350 = vpop.trf.xlu0
    %v351 = vpop.trf.xlu0
    %v352 = vpop.trf.xlu0
    %v353 = vpop.trf.xlu0
    %v354 = vpop.trf.xlu0
    %v355 = vpop.trf.xlu0
    %v356 = vpop.trf.xlu0
    %v357 = vpop.trf.xlu0
    %v358 = vpop.trf.xlu0
    %vm359 = vcmask 261120
    %v361 = vsel %vm359, %v343, 0
    %v364 = vsel %vm359, %v344, 0
    %v367 = vsel %vm359, %v345, 0
    %v370 = vsel %vm359, %v346, 0
    %v373 = vsel %vm359, %v347, 0
    %v376 = vsel %vm359, %v348, 0
    %v379 = vsel %vm359, %v349, 0
    %v382 = vsel %vm359, %v350, 0
    %v385 = vsel %vm359, %v351, 0
    %v388 = vsel %vm359, %v352, 0
    %v391 = vsel %vm359, %v353, 0
    %v394 = vsel %vm359, %v354, 0
    %v397 = vsel %vm359, %v355, 0
    %v400 = vsel %vm359, %v356, 0
    %v403 = vsel %vm359, %v357, 0
    %v406 = vsel %vm359, %v358, 0
    %408 = vmatprep.subr.mxu0 0.0
    %409 = vmatpush1.msra.mxu0 %v66
    %410 = vmatprep.subr.mxu0 0.0
    %411 = vmatpush1.msra.mxu0 %v67
    %412 = vmatprep.subr.mxu0 0.0
    %413 = vmatpush1.msra.mxu0 %v68
    %414 = vmatprep.subr.mxu0 0.0
    %415 = vmatpush1.msra.mxu0 %v69
    %416 = vmatprep.subr.mxu0 0.0
    %417 = vmatpush1.msra.mxu0 0.0
    %418 = vmatprep.subr.mxu0 0.0
    %419 = vmatpush1.msra.mxu0 0.0
    %420 = vmatprep.subr.mxu0 0.0
    %421 = vmatpush1.msra.mxu0 0.0
    %422 = vmatprep.subr.mxu0 0.0
    %423 = vmatpush1.msra.mxu0 0.0
    %424 = vmatprep.subr.mxu0 0.0
    %425 = vmatpush1.msra.mxu0 0.0
    %426 = vmatprep.subr.mxu0 0.0
    %427 = vmatpush1.msra.mxu0 0.0
    %428 = vmatprep.subr.mxu0 0.0
    %429 = vmatpush1.msra.mxu0 0.0
    %430 = vmatprep.subr.mxu0 0.0
    %431 = vmatpush1.msra.mxu0 0.0
    %432 = vmatprep.subr.mxu0 0.0
    %433 = vmatpush1.msra.mxu0 0.0
    %434 = vmatprep.subr.mxu0 0.0
    %435 = vmatpush1.msra.mxu0 0.0
    %436 = vmatprep.subr.mxu0 0.0
    %437 = vmatpush1.msra.mxu0 0.0
    %438 = vmatprep.subr.mxu0 0.0
    %439 = vmatpush1.msra.mxu0 0.0
    %440 = vmatprep.subr.mxu0 0.0
    %441 = vmatpush1.msra.mxu0 0.0
    %442 = vmatprep.subr.mxu0 0.0
    %443 = vmatpush1.msra.mxu0 0.0
    %444 = vmatprep.subr.mxu0 0.0
    %445 = vmatpush1.msra.mxu0 0.0
    %446 = vmatprep.subr.mxu0 0.0
    %447 = vmatpush1.msra.mxu0 0.0
    %448 = vmatprep.subr.mxu0 0.0
    %449 = vmatpush1.msra.mxu0 0.0
    %450 = vmatprep.subr.mxu0 0.0
    %451 = vmatpush1.msra.mxu0 0.0
    %452 = vmatprep.subr.mxu0 0.0
    %453 = vmatpush1.msra.mxu0 0.0
    %454 = vmatprep.subr.mxu0 0.0
    %455 = vmatpush1.msra.mxu0 0.0
    %456 = vmatprep.subr.mxu0 0.0
    %457 = vmatpush1.msra.mxu0 0.0
    %458 = vmatprep.subr.mxu0 0.0
    %459 = vmatpush1.msra.mxu0 0.0
    %460 = vmatprep.subr.mxu0 0.0
    %461 = vmatpush1.msra.mxu0 0.0
    %462 = vmatprep.subr.mxu0 0.0
    %463 = vmatpush1.msra.mxu0 0.0
    %464 = vmatprep.subr.mxu0 0.0
    %465 = vmatpush1.msra.mxu0 0.0
    %466 = vmatprep.subr.mxu0 0.0
    %467 = vmatpush1.msra.mxu0 0.0
    %468 = vmatprep.subr.mxu0 0.0
    %469 = vmatpush1.msra.mxu0 0.0
    %470 = vmatprep.subr.mxu0 0.0
    %471 = vmatpush1.msra.mxu0 0.0
    %472 = vmatprep.mubr.f32.mxu0 0.0
    %473 = vmatmul.mubr.f32.gmra.mrb[0].mxu0 %v361
    %v474 = vpop.f32.mrb[0].mxu0
    %v475 = vadd.f32 0.0, %v474
    %v476 = vpop.f32.mrb[0].mxu0
    %477 = vmatprep.mubr.f32.mxu0 0.0
    %478 = vmatmul.mubr.f32.gmra.mrb[0].mxu0 %v364
    %v479 = vpop.f32.mrb[0].mxu0
    %v480 = vadd.f32 0.0, %v479
    %v481 = vpop.f32.mrb[0].mxu0
    %482 = vmatprep.mubr.f32.mxu0 0.0
    %483 = vmatmul.mubr.f32.gmra.mrb[0].mxu0 %v367
    %v484 = vpop.f32.mrb[0].mxu0
    %v485 = vadd.f32 0.0, %v484
    %v486 = vpop.f32.mrb[0].mxu0
    %487 = vmatprep.mubr.f32.mxu0 0.0
    %488 = vmatmul.mubr.f32.gmra.mrb[0].mxu0 %v370
    %v489 = vpop.f32.mrb[0].mxu0
    %v490 = vadd.f32 0.0, %v489
    %v491 = vpop.f32.mrb[0].mxu0
    %492 = vmatprep.mubr.f32.mxu0 0.0
    %493 = vmatmul.mubr.f32.gmra.mrb[0].mxu0 %v373
    %v494 = vpop.f32.mrb[0].mxu0
    %v495 = vadd.f32 0.0, %v494
    %v496 = vpop.f32.mrb[0].mxu0
    %497 = vmatprep.mubr.f32.mxu0 0.0
    %498 = vmatmul.mubr.f32.gmra.mrb[0].mxu0 %v376
    %v499 = vpop.f32.mrb[0].mxu0
    %v500 = vadd.f32 0.0, %v499
    %v501 = vpop.f32.mrb[0].mxu0
    %502 = vmatprep.mubr.f32.mxu0 0.0
    %503 = vmatmul.mubr.f32.gmra.mrb[0].mxu0 %v379
    %v504 = vpop.f32.mrb[0].mxu0
    %v505 = vadd.f32 0.0, %v504
    %v506 = vpop.f32.mrb[0].mxu0
    %507 = vmatprep.mubr.f32.mxu0 0.0
    %508 = vmatmul.mubr.f32.gmra.mrb[0].mxu0 %v382
    %v509 = vpop.f32.mrb[0].mxu0
    %v510 = vadd.f32 0.0, %v509
    %v511 = vpop.f32.mrb[0].mxu0
    %512 = vmatprep.mubr.f32.mxu0 0.0
    %513 = vmatmul.mubr.f32.gmra.mrb[0].mxu0 %v385
    %v514 = vpop.f32.mrb[0].mxu0
    %v515 = vadd.f32 0.0, %v514
    %v516 = vpop.f32.mrb[0].mxu0
    %517 = vmatprep.mubr.f32.mxu0 0.0
    %518 = vmatmul.mubr.f32.gmra.mrb[0].mxu0 %v388
    %v519 = vpop.f32.mrb[0].mxu0
    %v520 = vadd.f32 0.0, %v519
    %v521 = vpop.f32.mrb[0].mxu0
    %522 = vmatprep.mubr.f32.mxu0 0.0
    %523 = vmatmul.mubr.f32.gmra.mrb[0].mxu0 %v391
    %v524 = vpop.f32.mrb[0].mxu0
    %v525 = vadd.f32 0.0, %v524
    %v526 = vpop.f32.mrb[0].mxu0
    %527 = vmatprep.mubr.f32.mxu0 0.0
    %528 = vmatmul.mubr.f32.gmra.mrb[0].mxu0 %v394
    %v529 = vpop.f32.mrb[0].mxu0
    %v530 = vadd.f32 0.0, %v529
    %v531 = vpop.f32.mrb[0].mxu0
    %532 = vmatprep.mubr.f32.mxu0 0.0
    %533 = vmatmul.mubr.f32.gmra.mrb[0].mxu0 %v397
    %v534 = vpop.f32.mrb[0].mxu0
    %v535 = vadd.f32 0.0, %v534
    %v536 = vpop.f32.mrb[0].mxu0
    %537 = vmatprep.mubr.f32.mxu0 0.0
    %538 = vmatmul.mubr.f32.gmra.mrb[0].mxu0 %v400
    %v539 = vpop.f32.mrb[0].mxu0
    %v540 = vadd.f32 0.0, %v539
    %v541 = vpop.f32.mrb[0].mxu0
    %542 = vmatprep.mubr.f32.mxu0 0.0
    %543 = vmatmul.mubr.f32.gmra.mrb[0].mxu0 %v403
    %v544 = vpop.f32.mrb[0].mxu0
    %v545 = vadd.f32 0.0, %v544
    %v546 = vpop.f32.mrb[0].mxu0
    %547 = vmatprep.mubr.f32.mxu0 0.0
    %548 = vmatmul.mubr.f32.gmra.mrb[0].mxu0 %v406
    %v549 = vpop.f32.mrb[0].mxu0
    %v550 = vadd.f32 0.0, %v549
    %v551 = vpop.f32.mrb[0].mxu0
    %552 = vdwg.mxu0
    %v553 = vmul.f32 %v249, %v475
    %v554 = vmul.f32 %v254, %v480
    %v555 = vmul.f32 %v259, %v485
    %v556 = vmul.f32 %v264, %v490
    %v557 = vmul.f32 %v269, %v495
    %v558 = vmul.f32 %v274, %v500
    %v559 = vmul.f32 %v279, %v505
    %v560 = vmul.f32 %v284, %v510
    %v561 = vmul.f32 %v289, %v515
    %v562 = vmul.f32 %v294, %v520
    %v563 = vmul.f32 %v299, %v525
    %v564 = vmul.f32 %v304, %v530
    %v565 = vmul.f32 %v309, %v535
    %v566 = vmul.f32 %v314, %v540
    %v567 = vmul.f32 %v319, %v545
    %v568 = vmul.f32 %v324, %v550
    %v570 = vsel %vm359, 1.0, 0
    %v573 = vsel %vm359, %v553, 0
    %v576 = vsel %vm359, %v554, 0
    %v579 = vsel %vm359, %v555, 0
    %v582 = vsel %vm359, %v556, 0
    %v585 = vsel %vm359, %v557, 0
    %v588 = vsel %vm359, %v558, 0
    %v591 = vsel %vm359, %v559, 0
    %v594 = vsel %vm359, %v560, 0
    %v597 = vsel %vm359, %v561, 0
    %v600 = vsel %vm359, %v562, 0
    %v603 = vsel %vm359, %v563, 0
    %v606 = vsel %vm359, %v564, 0
    %v609 = vsel %vm359, %v565, 0
    %v612 = vsel %vm359, %v566, 0
    %v615 = vsel %vm359, %v567, 0
    %v618 = vsel %vm359, %v568, 0
    %620 = vmatprep.subr.mxu0 0.0
    %621 = vmatpush1.xpose.msra.mxu0 %v573
    %622 = vmatprep.subr.mxu0 0.0
    %623 = vmatpush1.xpose.msra.mxu0 %v576
    %624 = vmatprep.subr.mxu0 0.0
    %625 = vmatpush1.xpose.msra.mxu0 %v579
    %626 = vmatprep.subr.mxu0 0.0
    %627 = vmatpush1.xpose.msra.mxu0 %v582
    %628 = vmatprep.subr.mxu0 0.0
    %629 = vmatpush1.xpose.msra.mxu0 %v585
    %630 = vmatprep.subr.mxu0 0.0
    %631 = vmatpush1.xpose.msra.mxu0 %v588
    %632 = vmatprep.subr.mxu0 0.0
    %633 = vmatpush1.xpose.msra.mxu0 %v591
    %634 = vmatprep.subr.mxu0 0.0
    %635 = vmatpush1.xpose.msra.mxu0 %v594
    %636 = vmatprep.subr.mxu0 0.0
    %637 = vmatpush1.xpose.msra.mxu0 %v597
    %638 = vmatprep.subr.mxu0 0.0
    %639 = vmatpush1.xpose.msra.mxu0 %v600
    %640 = vmatprep.subr.mxu0 0.0
    %641 = vmatpush1.xpose.msra.mxu0 %v603
    %642 = vmatprep.subr.mxu0 0.0
    %643 = vmatpush1.xpose.msra.mxu0 %v606
    %644 = vmatprep.subr.mxu0 0.0
    %645 = vmatpush1.xpose.msra.mxu0 %v609
    %646 = vmatprep.subr.mxu0 0.0
    %647 = vmatpush1.xpose.msra.mxu0 %v612
    %648 = vmatprep.subr.mxu0 0.0
    %649 = vmatpush1.xpose.msra.mxu0 %v615
    %650 = vmatprep.subr.mxu0 0.0
    %651 = vmatpush1.xpose.msra.mxu0 %v618
    %652 = vmatprep.subr.mxu0 0.0
    %653 = vmatpush1.xpose.msra.mxu0 0.0
    %654 = vmatprep.subr.mxu0 0.0
    %655 = vmatpush1.xpose.msra.mxu0 0.0
    %656 = vmatprep.subr.mxu0 0.0
    %657 = vmatpush1.xpose.msra.mxu0 0.0
    %658 = vmatprep.subr.mxu0 0.0
    %659 = vmatpush1.xpose.msra.mxu0 0.0
    %660 = vmatprep.subr.mxu0 0.0
    %661 = vmatpush1.xpose.msra.mxu0 0.0
    %662 = vmatprep.subr.mxu0 0.0
    %663 = vmatpush1.xpose.msra.mxu0 0.0
    %664 = vmatprep.subr.mxu0 0.0
    %665 = vmatpush1.xpose.msra.mxu0 0.0
    %666 = vmatprep.subr.mxu0 0.0
    %667 = vmatpush1.xpose.msra.mxu0 0.0
    %668 = vmatprep.subr.mxu0 0.0
    %669 = vmatpush1.xpose.msra.mxu0 0.0
    %670 = vmatprep.subr.mxu0 0.0
    %671 = vmatpush1.xpose.msra.mxu0 0.0
    %672 = vmatprep.subr.mxu0 0.0
    %673 = vmatpush1.xpose.msra.mxu0 0.0
    %674 = vmatprep.subr.mxu0 0.0
    %675 = vmatpush1.xpose.msra.mxu0 0.0
    %676 = vmatprep.subr.mxu0 0.0
    %677 = vmatpush1.xpose.msra.mxu0 0.0
    %678 = vmatprep.subr.mxu0 0.0
    %679 = vmatpush1.xpose.msra.mxu0 0.0
    %680 = vmatprep.subr.mxu0 0.0
    %681 = vmatpush1.xpose.msra.mxu0 0.0
    %682 = vmatprep.subr.mxu0 0.0
    %683 = vmatpush1.xpose.msra.mxu0 0.0
    %684 = vmatprep.mubr.f32.mxu0 0.0
    %685 = vmatmul.mubr.f32.gmra.mrb[0].mxu0 %v570
    %v686 = vpop.f32.mrb[0].mxu0
    %v687 = vadd.f32 0.0, %v686
    %v688 = vpop.f32.mrb[0].mxu0
    %689 = vdwg.mxu0
    %690 = vst [vmem:[#allocation8] sm:$0x1] %v687
    // Predicated region
    $region30: #{tpu_custom_call.1} parent=1 // pred_check
      _
    $region31: #{tpu_custom_call.1} parent=1 // pred_check_branch
      %692 = sbr.rel (0) target = $region33
    $region32: #{tpu_custom_call.1} parent=1 // pred_region
      %s694 = ssub.s32 16, 16
      %695 = vsyncadd [#allocation4], %s694
      %s697 = sshll.u32 [#allocation8], 4
      %s698 = int_to_ptr.vmem [resolvable:$true] %s697
      %700 = dma.vmem_to_hbm [thread:$0]  %s698, 16, %s4, [#allocation4]
    $region33: #{tpu_custom_call.1} parent=1 // pred_fallthru
      _
    // Predicated region
    $region34: #{tpu_custom_call.1} parent=1 // pred_check
      _
    $region35: #{tpu_custom_call.1} parent=1 // pred_check_branch
      %702 = sbr.rel (0) target = $region37
    $region36: #{tpu_custom_call.1} parent=1 // pred_region
      %703 = dma.done [#allocation4], 16
    $region37: #{tpu_custom_call.1} parent=1 // pred_fallthru
      _
    %704 = vsyncpa [#allocation3], 1
    %705 = vsyncpa [#allocation6], 1
    %706 = vsyncpa [#allocation4], 1

</llo_original>
